<compile_context>
chip_gen: v5e
topology: v5e:2x2
jax: 0.10.0
libtpu: 0.0.40
codegen_flags: <defaults>
</compile_context>

<pallas_src>
import functools

import jax
import jax.numpy as jnp
from jax.experimental import pallas as pl
from jax.experimental.pallas import tpu as pltpu

_EPS = 1e-5


def _conv_block_kernel(x_ref, b1_ref, b2_ref, gb_ref, pool_ref, o_ref, h1pad_ref,
                       *, n, h, w, cout, eps):
    """Fused (Conv3x3 -> BN -> ReLU) x 2.

    x_ref:     (N, H+2, W*Cin)    height-padded input slab (NHWC, (W,Cin) flattened to lanes)
    b1_ref:    (3, W*Cin,  W*Cout) banded stage-1 weights (width zero-pad folded into band)
    b2_ref:    (3, W*Cout, W*Cout) banded stage-2 weights
    gb_ref:    (4, W*Cout)         rows = gamma1, beta1, gamma2, beta2, each tiled across W
    pool_ref:  (W*Cout, W*Cout)    0/1 matrix, pool[i,j] = (i%Cout == j%Cout); a row-vector
                                   matmul with it gives per-channel sums re-broadcast to
                                   every lane of that channel.
    o_ref:     (N*H, W*Cout)       lane-dense output slab
    h1pad_ref: VMEM scratch (N, H+16, W*Cout); stage-1 activation, height-padded, with the
               real rows at the sublane-aligned offset [8, 8+H).
    """
    f32 = jnp.float32
    wc = w * cout
    inv_m = 1.0 / float(n * h * w)          # samples per channel for batch statistics
    pool = pool_ref[...]

    def conv(in_ref, band_ref, row0):
        # 'same' 3x3 conv = 3 row-shifted (H, K) @ (K, W*Cout) MXU matmuls per image.
        outs = []
        for img in range(n):
            acc = jnp.dot(in_ref[img, row0:row0 + h, :], band_ref[0],
                          preferred_element_type=f32)
            for dy in (1, 2):
                acc = acc + jnp.dot(in_ref[img, row0 + dy:row0 + dy + h, :],
                                    band_ref[dy], preferred_element_type=f32)
            outs.append(acc)
        return outs

    def bn_relu(outs, gamma, beta):
        # Training-mode BatchNorm (batch stats, biased var) folded into one FMA + ReLU.
        colsum = jnp.zeros((1, wc), f32)
        sqsum = jnp.zeros((1, wc), f32)
        for a in outs:                                   # single pass: sum and sum-of-squares
            colsum = colsum + jnp.sum(a, axis=0, keepdims=True)
            sqsum = sqsum + jnp.sum(a * a, axis=0, keepdims=True)
        mean = jnp.dot(colsum, pool, preferred_element_type=f32) * inv_m
        ex2 = jnp.dot(sqsum, pool, preferred_element_type=f32) * inv_m
        var = ex2 - mean * mean                          # biased variance (PyTorch norm)
        scale = gamma * jax.lax.rsqrt(var + eps)         # EUP
        shift = beta - mean * scale
        return [jnp.maximum(a * scale + shift, 0.0) for a in outs]

    # ---- stage 1: conv -> BN -> ReLU (activation stays in VMEM) ----
    h1 = bn_relu(conv(x_ref, b1_ref, 0), gb_ref[0:1, :], gb_ref[1:2, :])

    # Height-pad h1 into scratch (zero everything, then write real rows at aligned offset 8).
    h1pad_ref[...] = jnp.zeros(h1pad_ref.shape, f32)
    for img in range(n):
        h1pad_ref[img, 8:8 + h, :] = h1[img]

    # ---- stage 2: conv -> BN -> ReLU ----
    h2 = bn_relu(conv(h1pad_ref, b2_ref, 7), gb_ref[2:3, :], gb_ref[3:4, :])

    # Lane-dense, sublane-aligned output stores.
    for img in range(n):
        o_ref[img * h:(img + 1) * h, :] = h2[img]


def _band_weights(w_hwio, width):
    """(3,3,Cin,Cout) HWIO weights -> (3, W*Cin, W*Cout) banded matrices.

    band[dy, xx*Cin+ci, x*Cout+co] = w[dy, dx, ci, co] with xx = x + dx - 1 (zero outside
    the band), which folds the width-direction zero padding of the 'same' conv into the
    matmul so the kernel only needs height padding.
    """
    kh, kw, cin, cout = w_hwio.shape
    shift = jnp.stack([jnp.eye(width, width, k=1 - dx, dtype=w_hwio.dtype)
                       for dx in range(kw)])                     # shift[dx, xx, x] = [xx == x+dx-1]
    band = jnp.einsum('dpq,ydio->ypiqo', shift, w_hwio)          # (kh, W, Cin, W, Cout)
    return band.reshape(kh, width * cin, width * cout)


@jax.jit
def conv_block_forward(x_nchw, params):
    """ConvBlock.forward (training-mode BatchNorm): NCHW in, NCHW out (PyTorch semantics)."""
    n, cin, h, w = x_nchw.shape
    cout = params["w1"].shape[-1]
    wc = w * cout

    # NCHW -> NHWC, height zero-pad, flatten (W, Cin) into the lane dimension.
    x = jnp.transpose(x_nchw, (0, 2, 3, 1)).astype(jnp.float32)
    x = jnp.pad(x, ((0, 0), (1, 1), (0, 0), (0, 0)))
    x_slab = x.reshape(n, h + 2, w * cin)

    band1 = _band_weights(params["w1"].astype(jnp.float32), w)   # (3, W*Cin,  W*Cout)
    band2 = _band_weights(params["w2"].astype(jnp.float32), w)   # (3, W*Cout, W*Cout)

    # Per-channel affine params, pre-tiled across W so the epilogue is lane-dense.
    gb = jnp.stack([jnp.tile(params["gamma1"], w), jnp.tile(params["beta1"], w),
                    jnp.tile(params["gamma2"], w), jnp.tile(params["beta2"], w)]
                   ).astype(jnp.float32)                         # (4, W*Cout)

    # 0/1 channel pooling/broadcast matrix: pool[i, j] = (i % Cout == j % Cout).
    lane_chan = jnp.arange(wc, dtype=jnp.int32) % cout
    pool = (lane_chan[:, None] == lane_chan[None, :]).astype(jnp.float32)

    # NOTE: conv biases (params["b1"], params["b2"]) are intentionally NOT passed:
    # a per-channel constant added before training-mode BatchNorm is a no-op.
    out_slab = pl.pallas_call(
        functools.partial(_conv_block_kernel, n=n, h=h, w=w, cout=cout, eps=_EPS),
        out_shape=jax.ShapeDtypeStruct((n * h, wc), jnp.float32),
        in_specs=[pl.BlockSpec(memory_space=pltpu.MemorySpace.VMEM)] * 5,
        out_specs=pl.BlockSpec(memory_space=pltpu.MemorySpace.VMEM),
        scratch_shapes=[pltpu.VMEM((n, h + 16, wc), jnp.float32)],
    )(x_slab, band1, band2, gb, pool)

    out = out_slab.reshape(n, h, w, cout)       # (N*H, W*Cout) -> NHWC (free view)
    return jnp.transpose(out, (0, 3, 1, 2))     # NHWC -> NCHW


def init_params(key, in_channels, out_channels):
    """Deterministic synthetic parameters (shapes per nn.Conv2d / nn.BatchNorm2d)."""
    k1, k2, k3, k4 = jax.random.split(key, 4)
    s1 = 1.0 / jnp.sqrt(in_channels * 9.0)
    s2 = 1.0 / jnp.sqrt(out_channels * 9.0)
    return {
        # conv weights stored HWIO = (3, 3, Cin, Cout)
        "w1": jax.random.uniform(k1, (3, 3, in_channels, out_channels),
                                 jnp.float32, -s1, s1),
        "b1": jax.random.uniform(k2, (out_channels,), jnp.float32, -s1, s1),
        "gamma1": jnp.ones((out_channels,), jnp.float32),
        "beta1": jnp.zeros((out_channels,), jnp.float32),
        "w2": jax.random.uniform(k3, (3, 3, out_channels, out_channels),
                                 jnp.float32, -s2, s2),
        "b2": jax.random.uniform(k4, (out_channels,), jnp.float32, -s2, s2),
        "gamma2": jnp.ones((out_channels,), jnp.float32),
        "beta2": jnp.zeros((out_channels,), jnp.float32),
    }


def _reference_forward(x_nchw, params, eps=_EPS):
    """Pure-JAX reference (lax.conv + bias + batch-stat BN + ReLU) for verification."""
    x = jnp.transpose(x_nchw, (0, 2, 3, 1))

    def stage(x, w, b, g, beta):
        y = jax.lax.conv_general_dilated(
            x, w, window_strides=(1, 1), padding=((1, 1), (1, 1)),
            dimension_numbers=("NHWC", "HWIO", "NHWC"))
        y = y + b
        mean = jnp.mean(y, axis=(0, 1, 2), keepdims=True)
        var = jnp.mean((y - mean) ** 2, axis=(0, 1, 2), keepdims=True)
        y = (y - mean) * jax.lax.rsqrt(var + eps) * g + beta
        return jnp.maximum(y, 0.0)

    x = stage(x, params["w1"], params["b1"], params["gamma1"], params["beta1"])
    x = stage(x, params["w2"], params["b2"], params["gamma2"], params["beta2"])
    return jnp.transpose(x, (0, 3, 1, 2))


if __name__ == "__main__":
    key = jax.random.PRNGKey(0)
    k_x, k_p = jax.random.split(key)

    N, Cin, H, W = 2, 4, 16, 16
    Cout = 8

    x = jax.random.normal(k_x, (N, Cin, H, W), dtype=jnp.float32)
    params = init_params(k_p, Cin, Cout)

    out = jax.block_until_ready(conv_block_forward(x, params))
    assert out.shape == (N, Cout, H, W), out.shape

    ref = jax.block_until_ready(_reference_forward(x, params))
    max_err = float(jnp.max(jnp.abs(out - ref)))
    assert jnp.allclose(out, ref, atol=1e-4, rtol=1e-4), max_err

    print("KERNEL_OK")
</pallas_src>

<mosaic_0001>
module attributes {stable_mosaic.version = 11 : i64} {
  func.func @_conv_block_kernel(%arg0: memref<2x18x64xf32, #tpu.memory_space<vmem>>, %arg1: memref<3x64x128xf32, #tpu.memory_space<vmem>>, %arg2: memref<3x128x128xf32, #tpu.memory_space<vmem>>, %arg3: memref<4x128xf32, #tpu.memory_space<vmem>>, %arg4: memref<128x128xf32, #tpu.memory_space<vmem>>, %arg5: memref<32x128xf32, #tpu.memory_space<vmem>>, %arg6: memref<2x32x128xf32, #tpu.memory_space<vmem>>) attributes {dimension_semantics = [], scalar_prefetch = 0 : i64, scratch_operands = 1 : i64, tpu.core_type = #tpu.core_type<tc>} {
    %c0 = arith.constant 0 : index
    %c0_0 = arith.constant 0 : index
    %0 = vector.load %arg4[%c0, %c0_0] : memref<128x128xf32, #tpu.memory_space<vmem>>, vector<128x128xf32>
    %c0_1 = arith.constant 0 : index
    %c0_2 = arith.constant 0 : index
    %c0_3 = arith.constant 0 : index
    %1 = vector.load %arg0[%c0_1, %c0_2, %c0_3] : memref<2x18x64xf32, #tpu.memory_space<vmem>>, vector<1x16x64xf32>
    %2 = vector.shape_cast %1 : vector<1x16x64xf32> to vector<16x64xf32>
    %c0_4 = arith.constant 0 : index
    %c0_5 = arith.constant 0 : index
    %c0_6 = arith.constant 0 : index
    %3 = vector.load %arg1[%c0_4, %c0_5, %c0_6] : memref<3x64x128xf32, #tpu.memory_space<vmem>>, vector<1x64x128xf32>
    %4 = vector.shape_cast %3 : vector<1x64x128xf32> to vector<64x128xf32>
    %cst = arith.constant dense<0.000000e+00> : vector<16x128xf32>
    %5 = tpu.matmul %2, %4, %cst {dimension_numbers = #tpu.dot_dimension_numbers<[1], [0], [0], [1], [0, 0, 1, 1], [], []>} : vector<16x64xf32>, vector<64x128xf32>, vector<16x128xf32> -> vector<16x128xf32>
    %c0_7 = arith.constant 0 : index
    %c1 = arith.constant 1 : index
    %c0_8 = arith.constant 0 : index
    %6 = vector.load %arg0[%c0_7, %c1, %c0_8] : memref<2x18x64xf32, #tpu.memory_space<vmem>>, vector<1x16x64xf32>
    %7 = vector.shape_cast %6 : vector<1x16x64xf32> to vector<16x64xf32>
    %c1_9 = arith.constant 1 : index
    %c0_10 = arith.constant 0 : index
    %c0_11 = arith.constant 0 : index
    %8 = vector.load %arg1[%c1_9, %c0_10, %c0_11] : memref<3x64x128xf32, #tpu.memory_space<vmem>>, vector<1x64x128xf32>
    %9 = vector.shape_cast %8 : vector<1x64x128xf32> to vector<64x128xf32>
    %cst_12 = arith.constant dense<0.000000e+00> : vector<16x128xf32>
    %10 = tpu.matmul %7, %9, %cst_12 {dimension_numbers = #tpu.dot_dimension_numbers<[1], [0], [0], [1], [0, 0, 1, 1], [], []>} : vector<16x64xf32>, vector<64x128xf32>, vector<16x128xf32> -> vector<16x128xf32>
    %11 = arith.addf %5, %10 : vector<16x128xf32>
    %c0_13 = arith.constant 0 : index
    %c2 = arith.constant 2 : index
    %c0_14 = arith.constant 0 : index
    %12 = vector.load %arg0[%c0_13, %c2, %c0_14] : memref<2x18x64xf32, #tpu.memory_space<vmem>>, vector<1x16x64xf32>
    %13 = vector.shape_cast %12 : vector<1x16x64xf32> to vector<16x64xf32>
    %c2_15 = arith.constant 2 : index
    %c0_16 = arith.constant 0 : index
    %c0_17 = arith.constant 0 : index
    %14 = vector.load %arg1[%c2_15, %c0_16, %c0_17] : memref<3x64x128xf32, #tpu.memory_space<vmem>>, vector<1x64x128xf32>
    %15 = vector.shape_cast %14 : vector<1x64x128xf32> to vector<64x128xf32>
    %cst_18 = arith.constant dense<0.000000e+00> : vector<16x128xf32>
    %16 = tpu.matmul %13, %15, %cst_18 {dimension_numbers = #tpu.dot_dimension_numbers<[1], [0], [0], [1], [0, 0, 1, 1], [], []>} : vector<16x64xf32>, vector<64x128xf32>, vector<16x128xf32> -> vector<16x128xf32>
    %17 = arith.addf %11, %16 : vector<16x128xf32>
    %c1_19 = arith.constant 1 : index
    %c0_20 = arith.constant 0 : index
    %c0_21 = arith.constant 0 : index
    %18 = vector.load %arg0[%c1_19, %c0_20, %c0_21] : memref<2x18x64xf32, #tpu.memory_space<vmem>>, vector<1x16x64xf32>
    %19 = vector.shape_cast %18 : vector<1x16x64xf32> to vector<16x64xf32>
    %c0_22 = arith.constant 0 : index
    %c0_23 = arith.constant 0 : index
    %c0_24 = arith.constant 0 : index
    %20 = vector.load %arg1[%c0_22, %c0_23, %c0_24] : memref<3x64x128xf32, #tpu.memory_space<vmem>>, vector<1x64x128xf32>
    %21 = vector.shape_cast %20 : vector<1x64x128xf32> to vector<64x128xf32>
    %cst_25 = arith.constant dense<0.000000e+00> : vector<16x128xf32>
    %22 = tpu.matmul %19, %21, %cst_25 {dimension_numbers = #tpu.dot_dimension_numbers<[1], [0], [0], [1], [0, 0, 1, 1], [], []>} : vector<16x64xf32>, vector<64x128xf32>, vector<16x128xf32> -> vector<16x128xf32>
    %c1_26 = arith.constant 1 : index
    %c1_27 = arith.constant 1 : index
    %c0_28 = arith.constant 0 : index
    %23 = vector.load %arg0[%c1_26, %c1_27, %c0_28] : memref<2x18x64xf32, #tpu.memory_space<vmem>>, vector<1x16x64xf32>
    %24 = vector.shape_cast %23 : vector<1x16x64xf32> to vector<16x64xf32>
    %c1_29 = arith.constant 1 : index
    %c0_30 = arith.constant 0 : index
    %c0_31 = arith.constant 0 : index
    %25 = vector.load %arg1[%c1_29, %c0_30, %c0_31] : memref<3x64x128xf32, #tpu.memory_space<vmem>>, vector<1x64x128xf32>
    %26 = vector.shape_cast %25 : vector<1x64x128xf32> to vector<64x128xf32>
    %cst_32 = arith.constant dense<0.000000e+00> : vector<16x128xf32>
    %27 = tpu.matmul %24, %26, %cst_32 {dimension_numbers = #tpu.dot_dimension_numbers<[1], [0], [0], [1], [0, 0, 1, 1], [], []>} : vector<16x64xf32>, vector<64x128xf32>, vector<16x128xf32> -> vector<16x128xf32>
    %28 = arith.addf %22, %27 : vector<16x128xf32>
    %c1_33 = arith.constant 1 : index
    %c2_34 = arith.constant 2 : index
    %c0_35 = arith.constant 0 : index
    %29 = vector.load %arg0[%c1_33, %c2_34, %c0_35] : memref<2x18x64xf32, #tpu.memory_space<vmem>>, vector<1x16x64xf32>
    %30 = vector.shape_cast %29 : vector<1x16x64xf32> to vector<16x64xf32>
    %c2_36 = arith.constant 2 : index
    %c0_37 = arith.constant 0 : index
    %c0_38 = arith.constant 0 : index
    %31 = vector.load %arg1[%c2_36, %c0_37, %c0_38] : memref<3x64x128xf32, #tpu.memory_space<vmem>>, vector<1x64x128xf32>
    %32 = vector.shape_cast %31 : vector<1x64x128xf32> to vector<64x128xf32>
    %cst_39 = arith.constant dense<0.000000e+00> : vector<16x128xf32>
    %33 = tpu.matmul %30, %32, %cst_39 {dimension_numbers = #tpu.dot_dimension_numbers<[1], [0], [0], [1], [0, 0, 1, 1], [], []>} : vector<16x64xf32>, vector<64x128xf32>, vector<16x128xf32> -> vector<16x128xf32>
    %34 = arith.addf %28, %33 : vector<16x128xf32>
    %c0_40 = arith.constant 0 : index
    %c0_41 = arith.constant 0 : index
    %35 = vector.load %arg3[%c0_40, %c0_41] : memref<4x128xf32, #tpu.memory_space<vmem>>, vector<1x128xf32>
    %c1_42 = arith.constant 1 : index
    %c0_43 = arith.constant 0 : index
    %36 = vector.load %arg3[%c1_42, %c0_43] : memref<4x128xf32, #tpu.memory_space<vmem>>, vector<1x128xf32>
    %cst_44 = arith.constant 0.000000e+00 : f32
    %37 = vector.broadcast %cst_44 : f32 to vector<1x128xf32>
    %cst_45 = arith.constant 0.000000e+00 : f32
    %38 = vector.broadcast %cst_45 : f32 to vector<1x128xf32>
    %cst_46 = arith.constant dense<0.000000e+00> : vector<128xf32>
    %39 = vector.multi_reduction <add>, %17, %cst_46 [0] : vector<16x128xf32> to vector<128xf32>
    %40 = vector.shape_cast %39 : vector<128xf32> to vector<1x128xf32>
    %41 = arith.addf %37, %40 : vector<1x128xf32>
    %42 = arith.mulf %17, %17 : vector<16x128xf32>
    %cst_47 = arith.constant dense<0.000000e+00> : vector<128xf32>
    %43 = vector.multi_reduction <add>, %42, %cst_47 [0] : vector<16x128xf32> to vector<128xf32>
    %44 = vector.shape_cast %43 : vector<128xf32> to vector<1x128xf32>
    %45 = arith.addf %38, %44 : vector<1x128xf32>
    %cst_48 = arith.constant dense<0.000000e+00> : vector<128xf32>
    %46 = vector.multi_reduction <add>, %34, %cst_48 [0] : vector<16x128xf32> to vector<128xf32>
    %47 = vector.shape_cast %46 : vector<128xf32> to vector<1x128xf32>
    %48 = arith.addf %41, %47 : vector<1x128xf32>
    %49 = arith.mulf %34, %34 : vector<16x128xf32>
    %cst_49 = arith.constant dense<0.000000e+00> : vector<128xf32>
    %50 = vector.multi_reduction <add>, %49, %cst_49 [0] : vector<16x128xf32> to vector<128xf32>
    %51 = vector.shape_cast %50 : vector<128xf32> to vector<1x128xf32>
    %52 = arith.addf %45, %51 : vector<1x128xf32>
    %cst_50 = arith.constant dense<0.000000e+00> : vector<1x128xf32>
    %53 = tpu.matmul %48, %0, %cst_50 {dimension_numbers = #tpu.dot_dimension_numbers<[1], [0], [0], [1], [0, 0, 1, 1], [], []>} : vector<1x128xf32>, vector<128x128xf32>, vector<1x128xf32> -> vector<1x128xf32>
    %cst_51 = arith.constant 0.001953125 : f32
    %54 = vector.broadcast %cst_51 : f32 to vector<1x128xf32>
    %55 = arith.mulf %53, %54 : vector<1x128xf32>
    %cst_52 = arith.constant dense<0.000000e+00> : vector<1x128xf32>
    %56 = tpu.matmul %52, %0, %cst_52 {dimension_numbers = #tpu.dot_dimension_numbers<[1], [0], [0], [1], [0, 0, 1, 1], [], []>} : vector<1x128xf32>, vector<128x128xf32>, vector<1x128xf32> -> vector<1x128xf32>
    %cst_53 = arith.constant 0.001953125 : f32
    %57 = vector.broadcast %cst_53 : f32 to vector<1x128xf32>
    %58 = arith.mulf %56, %57 : vector<1x128xf32>
    %59 = arith.mulf %55, %55 : vector<1x128xf32>
    %60 = arith.subf %58, %59 : vector<1x128xf32>
    %cst_54 = arith.constant 9.99999974E-6 : f32
    %61 = vector.broadcast %cst_54 : f32 to vector<1x128xf32>
    %62 = arith.addf %60, %61 : vector<1x128xf32>
    %63 = math.rsqrt %62 : vector<1x128xf32>
    %64 = arith.mulf %35, %63 : vector<1x128xf32>
    %65 = arith.mulf %55, %64 : vector<1x128xf32>
    %66 = arith.subf %36, %65 : vector<1x128xf32>
    %67 = vector.broadcast %64 : vector<1x128xf32> to vector<16x128xf32>
    %68 = arith.mulf %17, %67 : vector<16x128xf32>
    %69 = vector.broadcast %66 : vector<1x128xf32> to vector<16x128xf32>
    %70 = arith.addf %68, %69 : vector<16x128xf32>
    %cst_55 = arith.constant 0.000000e+00 : f32
    %71 = vector.broadcast %cst_55 : f32 to vector<16x128xf32>
    %72 = arith.maximumf %70, %71 : vector<16x128xf32>
    %73 = vector.broadcast %64 : vector<1x128xf32> to vector<16x128xf32>
    %74 = arith.mulf %34, %73 : vector<16x128xf32>
    %75 = vector.broadcast %66 : vector<1x128xf32> to vector<16x128xf32>
    %76 = arith.addf %74, %75 : vector<16x128xf32>
    %cst_56 = arith.constant 0.000000e+00 : f32
    %77 = vector.broadcast %cst_56 : f32 to vector<16x128xf32>
    %78 = arith.maximumf %76, %77 : vector<16x128xf32>
    %cst_57 = arith.constant 0.000000e+00 : f32
    %79 = vector.broadcast %cst_57 : f32 to vector<2x32x128xf32>
    %c0_58 = arith.constant 0 : index
    %c0_59 = arith.constant 0 : index
    %c0_60 = arith.constant 0 : index
    %80 = vector.load %arg6[%c0_58, %c0_59, %c0_60] : memref<2x32x128xf32, #tpu.memory_space<vmem>>, vector<2x32x128xf32>
    tpu.vector_store %arg6[%c0_58, %c0_59, %c0_60], %79 {strides = array<i32>} : memref<2x32x128xf32, #tpu.memory_space<vmem>>, vector<2x32x128xf32>,
    %c0_61 = arith.constant 0 : index
    %c8 = arith.constant 8 : index
    %c0_62 = arith.constant 0 : index
    %81 = vector.load %arg6[%c0_61, %c8, %c0_62] : memref<2x32x128xf32, #tpu.memory_space<vmem>>, vector<1x16x128xf32>
    %82 = vector.shape_cast %81 : vector<1x16x128xf32> to vector<16x128xf32>
    %83 = vector.shape_cast %72 : vector<16x128xf32> to vector<1x16x128xf32>
    tpu.vector_store %arg6[%c0_61, %c8, %c0_62], %83 {strides = array<i32>} : memref<2x32x128xf32, #tpu.memory_space<vmem>>, vector<1x16x128xf32>,
    %c1_63 = arith.constant 1 : index
    %c8_64 = arith.constant 8 : index
    %c0_65 = arith.constant 0 : index
    %84 = vector.load %arg6[%c1_63, %c8_64, %c0_65] : memref<2x32x128xf32, #tpu.memory_space<vmem>>, vector<1x16x128xf32>
    %85 = vector.shape_cast %84 : vector<1x16x128xf32> to vector<16x128xf32>
    %86 = vector.shape_cast %78 : vector<16x128xf32> to vector<1x16x128xf32>
    tpu.vector_store %arg6[%c1_63, %c8_64, %c0_65], %86 {strides = array<i32>} : memref<2x32x128xf32, #tpu.memory_space<vmem>>, vector<1x16x128xf32>,
    %c0_66 = arith.constant 0 : index
    %c7 = arith.constant 7 : index
    %c0_67 = arith.constant 0 : index
    %87 = vector.load %arg6[%c0_66, %c7, %c0_67] : memref<2x32x128xf32, #tpu.memory_space<vmem>>, vector<1x16x128xf32>
    %88 = vector.shape_cast %87 : vector<1x16x128xf32> to vector<16x128xf32>
    %c0_68 = arith.constant 0 : index
    %c0_69 = arith.constant 0 : index
    %c0_70 = arith.constant 0 : index
    %89 = vector.load %arg2[%c0_68, %c0_69, %c0_70] : memref<3x128x128xf32, #tpu.memory_space<vmem>>, vector<1x128x128xf32>
    %90 = vector.shape_cast %89 : vector<1x128x128xf32> to vector<128x128xf32>
    %cst_71 = arith.constant dense<0.000000e+00> : vector<16x128xf32>
    %91 = tpu.matmul %88, %90, %cst_71 {dimension_numbers = #tpu.dot_dimension_numbers<[1], [0], [0], [1], [0, 0, 1, 1], [], []>} : vector<16x128xf32>, vector<128x128xf32>, vector<16x128xf32> -> vector<16x128xf32>
    %c0_72 = arith.constant 0 : index
    %c8_73 = arith.constant 8 : index
    %c0_74 = arith.constant 0 : index
    %92 = vector.load %arg6[%c0_72, %c8_73, %c0_74] : memref<2x32x128xf32, #tpu.memory_space<vmem>>, vector<1x16x128xf32>
    %93 = vector.shape_cast %92 : vector<1x16x128xf32> to vector<16x128xf32>
    %c1_75 = arith.constant 1 : index
    %c0_76 = arith.constant 0 : index
    %c0_77 = arith.constant 0 : index
    %94 = vector.load %arg2[%c1_75, %c0_76, %c0_77] : memref<3x128x128xf32, #tpu.memory_space<vmem>>, vector<1x128x128xf32>
    %95 = vector.shape_cast %94 : vector<1x128x128xf32> to vector<128x128xf32>
    %cst_78 = arith.constant dense<0.000000e+00> : vector<16x128xf32>
    %96 = tpu.matmul %93, %95, %cst_78 {dimension_numbers = #tpu.dot_dimension_numbers<[1], [0], [0], [1], [0, 0, 1, 1], [], []>} : vector<16x128xf32>, vector<128x128xf32>, vector<16x128xf32> -> vector<16x128xf32>
    %97 = arith.addf %91, %96 : vector<16x128xf32>
    %c0_79 = arith.constant 0 : index
    %c9 = arith.constant 9 : index
    %c0_80 = arith.constant 0 : index
    %98 = vector.load %arg6[%c0_79, %c9, %c0_80] : memref<2x32x128xf32, #tpu.memory_space<vmem>>, vector<1x16x128xf32>
    %99 = vector.shape_cast %98 : vector<1x16x128xf32> to vector<16x128xf32>
    %c2_81 = arith.constant 2 : index
    %c0_82 = arith.constant 0 : index
    %c0_83 = arith.constant 0 : index
    %100 = vector.load %arg2[%c2_81, %c0_82, %c0_83] : memref<3x128x128xf32, #tpu.memory_space<vmem>>, vector<1x128x128xf32>
    %101 = vector.shape_cast %100 : vector<1x128x128xf32> to vector<128x128xf32>
    %cst_84 = arith.constant dense<0.000000e+00> : vector<16x128xf32>
    %102 = tpu.matmul %99, %101, %cst_84 {dimension_numbers = #tpu.dot_dimension_numbers<[1], [0], [0], [1], [0, 0, 1, 1], [], []>} : vector<16x128xf32>, vector<128x128xf32>, vector<16x128xf32> -> vector<16x128xf32>
    %103 = arith.addf %97, %102 : vector<16x128xf32>
    %c1_85 = arith.constant 1 : index
    %c7_86 = arith.constant 7 : index
    %c0_87 = arith.constant 0 : index
    %104 = vector.load %arg6[%c1_85, %c7_86, %c0_87] : memref<2x32x128xf32, #tpu.memory_space<vmem>>, vector<1x16x128xf32>
    %105 = vector.shape_cast %104 : vector<1x16x128xf32> to vector<16x128xf32>
    %c0_88 = arith.constant 0 : index
    %c0_89 = arith.constant 0 : index
    %c0_90 = arith.constant 0 : index
    %106 = vector.load %arg2[%c0_88, %c0_89, %c0_90] : memref<3x128x128xf32, #tpu.memory_space<vmem>>, vector<1x128x128xf32>
    %107 = vector.shape_cast %106 : vector<1x128x128xf32> to vector<128x128xf32>
    %cst_91 = arith.constant dense<0.000000e+00> : vector<16x128xf32>
    %108 = tpu.matmul %105, %107, %cst_91 {dimension_numbers = #tpu.dot_dimension_numbers<[1], [0], [0], [1], [0, 0, 1, 1], [], []>} : vector<16x128xf32>, vector<128x128xf32>, vector<16x128xf32> -> vector<16x128xf32>
    %c1_92 = arith.constant 1 : index
    %c8_93 = arith.constant 8 : index
    %c0_94 = arith.constant 0 : index
    %109 = vector.load %arg6[%c1_92, %c8_93, %c0_94] : memref<2x32x128xf32, #tpu.memory_space<vmem>>, vector<1x16x128xf32>
    %110 = vector.shape_cast %109 : vector<1x16x128xf32> to vector<16x128xf32>
    %c1_95 = arith.constant 1 : index
    %c0_96 = arith.constant 0 : index
    %c0_97 = arith.constant 0 : index
    %111 = vector.load %arg2[%c1_95, %c0_96, %c0_97] : memref<3x128x128xf32, #tpu.memory_space<vmem>>, vector<1x128x128xf32>
    %112 = vector.shape_cast %111 : vector<1x128x128xf32> to vector<128x128xf32>
    %cst_98 = arith.constant dense<0.000000e+00> : vector<16x128xf32>
    %113 = tpu.matmul %110, %112, %cst_98 {dimension_numbers = #tpu.dot_dimension_numbers<[1], [0], [0], [1], [0, 0, 1, 1], [], []>} : vector<16x128xf32>, vector<128x128xf32>, vector<16x128xf32> -> vector<16x128xf32>
    %114 = arith.addf %108, %113 : vector<16x128xf32>
    %c1_99 = arith.constant 1 : index
    %c9_100 = arith.constant 9 : index
    %c0_101 = arith.constant 0 : index
    %115 = vector.load %arg6[%c1_99, %c9_100, %c0_101] : memref<2x32x128xf32, #tpu.memory_space<vmem>>, vector<1x16x128xf32>
    %116 = vector.shape_cast %115 : vector<1x16x128xf32> to vector<16x128xf32>
    %c2_102 = arith.constant 2 : index
    %c0_103 = arith.constant 0 : index
    %c0_104 = arith.constant 0 : index
    %117 = vector.load %arg2[%c2_102, %c0_103, %c0_104] : memref<3x128x128xf32, #tpu.memory_space<vmem>>, vector<1x128x128xf32>
    %118 = vector.shape_cast %117 : vector<1x128x128xf32> to vector<128x128xf32>
    %cst_105 = arith.constant dense<0.000000e+00> : vector<16x128xf32>
    %119 = tpu.matmul %116, %118, %cst_105 {dimension_numbers = #tpu.dot_dimension_numbers<[1], [0], [0], [1], [0, 0, 1, 1], [], []>} : vector<16x128xf32>, vector<128x128xf32>, vector<16x128xf32> -> vector<16x128xf32>
    %120 = arith.addf %114, %119 : vector<16x128xf32>
    %c2_106 = arith.constant 2 : index
    %c0_107 = arith.constant 0 : index
    %121 = vector.load %arg3[%c2_106, %c0_107] : memref<4x128xf32, #tpu.memory_space<vmem>>, vector<1x128xf32>
    %c3 = arith.constant 3 : index
    %c0_108 = arith.constant 0 : index
    %122 = vector.load %arg3[%c3, %c0_108] : memref<4x128xf32, #tpu.memory_space<vmem>>, vector<1x128xf32>
    %cst_109 = arith.constant 0.000000e+00 : f32
    %123 = vector.broadcast %cst_109 : f32 to vector<1x128xf32>
    %cst_110 = arith.constant 0.000000e+00 : f32
    %124 = vector.broadcast %cst_110 : f32 to vector<1x128xf32>
    %cst_111 = arith.constant dense<0.000000e+00> : vector<128xf32>
    %125 = vector.multi_reduction <add>, %103, %cst_111 [0] : vector<16x128xf32> to vector<128xf32>
    %126 = vector.shape_cast %125 : vector<128xf32> to vector<1x128xf32>
    %127 = arith.addf %123, %126 : vector<1x128xf32>
    %128 = arith.mulf %103, %103 : vector<16x128xf32>
    %cst_112 = arith.constant dense<0.000000e+00> : vector<128xf32>
    %129 = vector.multi_reduction <add>, %128, %cst_112 [0] : vector<16x128xf32> to vector<128xf32>
    %130 = vector.shape_cast %129 : vector<128xf32> to vector<1x128xf32>
    %131 = arith.addf %124, %130 : vector<1x128xf32>
    %cst_113 = arith.constant dense<0.000000e+00> : vector<128xf32>
    %132 = vector.multi_reduction <add>, %120, %cst_113 [0] : vector<16x128xf32> to vector<128xf32>
    %133 = vector.shape_cast %132 : vector<128xf32> to vector<1x128xf32>
    %134 = arith.addf %127, %133 : vector<1x128xf32>
    %135 = arith.mulf %120, %120 : vector<16x128xf32>
    %cst_114 = arith.constant dense<0.000000e+00> : vector<128xf32>
    %136 = vector.multi_reduction <add>, %135, %cst_114 [0] : vector<16x128xf32> to vector<128xf32>
    %137 = vector.shape_cast %136 : vector<128xf32> to vector<1x128xf32>
    %138 = arith.addf %131, %137 : vector<1x128xf32>
    %cst_115 = arith.constant dense<0.000000e+00> : vector<1x128xf32>
    %139 = tpu.matmul %134, %0, %cst_115 {dimension_numbers = #tpu.dot_dimension_numbers<[1], [0], [0], [1], [0, 0, 1, 1], [], []>} : vector<1x128xf32>, vector<128x128xf32>, vector<1x128xf32> -> vector<1x128xf32>
    %cst_116 = arith.constant 0.001953125 : f32
    %140 = vector.broadcast %cst_116 : f32 to vector<1x128xf32>
    %141 = arith.mulf %139, %140 : vector<1x128xf32>
    %cst_117 = arith.constant dense<0.000000e+00> : vector<1x128xf32>
    %142 = tpu.matmul %138, %0, %cst_117 {dimension_numbers = #tpu.dot_dimension_numbers<[1], [0], [0], [1], [0, 0, 1, 1], [], []>} : vector<1x128xf32>, vector<128x128xf32>, vector<1x128xf32> -> vector<1x128xf32>
    %cst_118 = arith.constant 0.001953125 : f32
    %143 = vector.broadcast %cst_118 : f32 to vector<1x128xf32>
    %144 = arith.mulf %142, %143 : vector<1x128xf32>
    %145 = arith.mulf %141, %141 : vector<1x128xf32>
    %146 = arith.subf %144, %145 : vector<1x128xf32>
    %cst_119 = arith.constant 9.99999974E-6 : f32
    %147 = vector.broadcast %cst_119 : f32 to vector<1x128xf32>
    %148 = arith.addf %146, %147 : vector<1x128xf32>
    %149 = math.rsqrt %148 : vector<1x128xf32>
    %150 = arith.mulf %121, %149 : vector<1x128xf32>
    %151 = arith.mulf %141, %150 : vector<1x128xf32>
    %152 = arith.subf %122, %151 : vector<1x128xf32>
    %153 = vector.broadcast %150 : vector<1x128xf32> to vector<16x128xf32>
    %154 = arith.mulf %103, %153 : vector<16x128xf32>
    %155 = vector.broadcast %152 : vector<1x128xf32> to vector<16x128xf32>
    %156 = arith.addf %154, %155 : vector<16x128xf32>
    %cst_120 = arith.constant 0.000000e+00 : f32
    %157 = vector.broadcast %cst_120 : f32 to vector<16x128xf32>
    %158 = arith.maximumf %156, %157 : vector<16x128xf32>
    %159 = vector.broadcast %150 : vector<1x128xf32> to vector<16x128xf32>
    %160 = arith.mulf %120, %159 : vector<16x128xf32>
    %161 = vector.broadcast %152 : vector<1x128xf32> to vector<16x128xf32>
    %162 = arith.addf %160, %161 : vector<16x128xf32>
    %cst_121 = arith.constant 0.000000e+00 : f32
    %163 = vector.broadcast %cst_121 : f32 to vector<16x128xf32>
    %164 = arith.maximumf %162, %163 : vector<16x128xf32>
    %c0_122 = arith.constant 0 : index
    %c0_123 = arith.constant 0 : index
    %165 = vector.load %arg5[%c0_122, %c0_123] : memref<32x128xf32, #tpu.memory_space<vmem>>, vector<16x128xf32>
    tpu.vector_store %arg5[%c0_122, %c0_123], %158 {strides = array<i32>} : memref<32x128xf32, #tpu.memory_space<vmem>>, vector<16x128xf32>,
    %c16 = arith.constant 16 : index
    %c0_124 = arith.constant 0 : index
    %166 = vector.load %arg5[%c16, %c0_124] : memref<32x128xf32, #tpu.memory_space<vmem>>, vector<16x128xf32>
    tpu.vector_store %arg5[%c16, %c0_124], %164 {strides = array<i32>} : memref<32x128xf32, #tpu.memory_space<vmem>>, vector<16x128xf32>,
    return
  }
}

</mosaic_0001>

<llo_original>
// kernel: tile.23
$region0: #{tile.23}
  #allocation0 [shape = 's32[1]{0}', space=sflag, size = 0x4, scoped, tag = 'scoped memory for tile.23']
  %s0 = inlined_call_operand.vmem [shape: f32[8], index: 0, kind: input, shape index: {}]
  %s1 = inlined_call_operand.vmem [shape: f32[16,8], index: 1, kind: output, shape index: {}]
  // Predicated region
  $region2: #{tile.23} parent=0 // pred_check
    _
  $region3: #{tile.23} parent=0 // pred_check_branch
    %3 = sbr.rel (0) target = $region5
  $region4: #{tile.23} parent=0 // pred_region
    _
  $region5: #{tile.23} parent=0 // pred_fallthru
    _
  %v4 = vld [vmem:[%s0] ss:$0 sm:$0xff]
  %5 = vst [vmem:[%s1] sm:$0xff] %v4
  %s6 = scalar_lea.vmem %s1, 8
  %7 = vst [vmem:[%s6] sm:$0xff] %v4

// kernel: tile.36
$region0: #{tile.36}
  %s0 = inlined_call_operand.vmem [shape: f32[16,8], index: 0, kind: input, shape index: {}]
  %s1 = inlined_call_operand.vmem [shape: f32[1,128], index: 1, kind: output, shape index: {}]
  $region1: #{tile.36} parent=0
    #allocation0 [shape = 'u8[4096]{0}', space=vmem, size = 0x1000, scoped, tag = 'scoped mem for output reshape']
    %v2 = vld [vmem:[%s0] sm:$0x1]
    %vm3 = vcmask 64512
    %4 = vst.msk [vmem:[#allocation0] sm:$0x1] %vm3, %v2
    %s5 = scalar_lea.vmem %s0, 15
    %v6 = vld [vmem:[%s5] sm:$0x1]
    %7 = vrot.lane.b32.xlu0 %v6, 120
    %v8 = vpop.permute.xlu0 %7
    %vm9 = vcmask 1048512
    %10 = vst.msk [vmem:[#allocation0] sm:$0x1] %vm9, %v8
    %s11 = scalar_lea.vmem %s0, 14
    %v12 = vld [vmem:[%s11] sm:$0x1]
    %13 = vrot.lane.b32.xlu0 %v12, 112
    %v14 = vpop.permute.xlu0 %13
    %vm15 = vcmask 982912
    %16 = vst.msk [vmem:[#allocation0] sm:$0x1] %vm15, %v14
    %s17 = scalar_lea.vmem %s0, 13
    %v18 = vld [vmem:[%s17] sm:$0x1]
    %19 = vrot.lane.b32.xlu0 %v18, 104
    %v20 = vpop.permute.xlu0 %19
    %vm21 = vcmask 917312
    %22 = vst.msk [vmem:[#allocation0] sm:$0x1] %vm21, %v20
    %s23 = scalar_lea.vmem %s0, 12
    %v24 = vld [vmem:[%s23] sm:$0x1]
    %25 = vrot.lane.b32.xlu0 %v24, 96
    %v26 = vpop.permute.xlu0 %25
    %vm27 = vcmask 851712
    %28 = vst.msk [vmem:[#allocation0] sm:$0x1] %vm27, %v26
    %s29 = scalar_lea.vmem %s0, 11
    %v30 = vld [vmem:[%s29] sm:$0x1]
    %31 = vrot.lane.b32.xlu0 %v30, 88
    %v32 = vpop.permute.xlu0 %31
    %vm33 = vcmask 786112
    %34 = vst.msk [vmem:[#allocation0] sm:$0x1] %vm33, %v32
    %s35 = scalar_lea.vmem %s0, 10
    %v36 = vld [vmem:[%s35] sm:$0x1]
    %37 = vrot.lane.b32.xlu0 %v36, 80
    %v38 = vpop.permute.xlu0 %37
    %vm39 = vcmask 720512
    %40 = vst.msk [vmem:[#allocation0] sm:$0x1] %vm39, %v38
    %s41 = scalar_lea.vmem %s0, 9
    %v42 = vld [vmem:[%s41] sm:$0x1]
    %43 = vrot.lane.b32.xlu0 %v42, 72
    %v44 = vpop.permute.xlu0 %43
    %vm45 = vcmask 654912
    %46 = vst.msk [vmem:[#allocation0] sm:$0x1] %vm45, %v44
    %s47 = scalar_lea.vmem %s0, 8
    %v48 = vld [vmem:[%s47] sm:$0x1]
    %49 = vrot.lane.b32.xlu0 %v48, 64
    %v50 = vpop.permute.xlu0 %49
    %vm51 = vcmask 589312
    %52 = vst.msk [vmem:[#allocation0] sm:$0x1] %vm51, %v50
    %s53 = scalar_lea.vmem %s0, 7
    %v54 = vld [vmem:[%s53] sm:$0x1]
    %55 = vrot.lane.b32.xlu0 %v54, 56
    %v56 = vpop.permute.xlu0 %55
    %vm57 = vcmask 523712
    %58 = vst.msk [vmem:[#allocation0] sm:$0x1] %vm57, %v56
    %s59 = scalar_lea.vmem %s0, 6
    %v60 = vld [vmem:[%s59] sm:$0x1]
    %61 = vrot.lane.b32.xlu0 %v60, 48
    %v62 = vpop.permute.xlu0 %61
    %vm63 = vcmask 458112
    %64 = vst.msk [vmem:[#allocation0] sm:$0x1] %vm63, %v62
    %s65 = scalar_lea.vmem %s0, 5
    %v66 = vld [vmem:[%s65] sm:$0x1]
    %67 = vrot.lane.b32.xlu0 %v66, 40
    %v68 = vpop.permute.xlu0 %67
    %vm69 = vcmask 392512
    %70 = vst.msk [vmem:[#allocation0] sm:$0x1] %vm69, %v68
    %s71 = scalar_lea.vmem %s0, 4
    %v72 = vld [vmem:[%s71] sm:$0x1]
    %73 = vrot.lane.b32.xlu0 %v72, 32
    %v74 = vpop.permute.xlu0 %73
    %vm75 = vcmask 326912
    %76 = vst.msk [vmem:[#allocation0] sm:$0x1] %vm75, %v74
    %s77 = scalar_lea.vmem %s0, 3
    %v78 = vld [vmem:[%s77] sm:$0x1]
    %79 = vrot.lane.b32.xlu0 %v78, 24
    %v80 = vpop.permute.xlu0 %79
    %vm81 = vcmask 261312
    %82 = vst.msk [vmem:[#allocation0] sm:$0x1] %vm81, %v80
    %s83 = scalar_lea.vmem %s0, 2
    %v84 = vld [vmem:[%s83] sm:$0x1]
    %85 = vrot.lane.b32.xlu0 %v84, 16
    %v86 = vpop.permute.xlu0 %85
    %vm87 = vcmask 195712
    %88 = vst.msk [vmem:[#allocation0] sm:$0x1] %vm87, %v86
    %s89 = scalar_lea.vmem %s0, 1
    %v90 = vld [vmem:[%s89] sm:$0x1]
    %91 = vrot.lane.b32.xlu0 %v90, 8
    %v92 = vpop.permute.xlu0 %91
    %vm93 = vcmask 130112
    %94 = vst.msk [vmem:[#allocation0] sm:$0x1] %vm93, %v92
    %s96 = ssub.s32 2, 1
    %v97 = vld [vmem:[#allocation0] sm:%s96]
    %s99 = ssub.s32 2, 1
    %100 = vst [vmem:[%s1] sm:%s99] %v97

// kernel: conv_block_forward.1
$region0: #{conv_block_forward.1}
  #allocation0 [shape = 'u32[]', space=smem, size = 0x4, offset = 0x4, fixed_abs, tag = 'smem constant byte address 0x4 - core index']
  #allocation1 [shape = 'u32[72,128]{1,0:T(1,128)}', space=vmem, size = 0x9000, scoped, tag = 'internal scratch']
  #allocation2 [shape = 'f32[2,32,128]{2,1,0:T(8,128)}', space=vmem, size = 0x8000, scoped, tag = 'scratch operand']
  %s0 = inlined_call_operand.vmem [shape: f32[2,18,64], index: 0, kind: input, shape index: {}]
  %s1 = inlined_call_operand.vmem [shape: f32[3,64,128], index: 1, kind: input, shape index: {}]
  %s2 = inlined_call_operand.vmem [shape: f32[3,128,128], index: 2, kind: input, shape index: {}]
  %s3 = inlined_call_operand.vmem [shape: f32[4,128], index: 3, kind: input, shape index: {}]
  %s4 = inlined_call_operand.vmem [shape: f32[128,128], index: 4, kind: input, shape index: {}]
  %s5 = inlined_call_operand.vmem [shape: f32[32,128], index: 5, kind: output, shape index: {}]
  %s6 = sld [smem:[#allocation0]]
  $region30: #{conv_block_forward.1} parent=0
    _
  %s8 = ssub.s32 1, %s6
  %s9 = scalar_select 0, %s8, %s6
  // Predicated region
  $region2: #{conv_block_forward.1} parent=0 // pred_check
    _
  $region3: #{conv_block_forward.1} parent=0 // pred_check_branch
    %11 = sbr.rel (0) target = $region5
  $region4: #{conv_block_forward.1} parent=0 // pred_region
    _
  $region5: #{conv_block_forward.1} parent=0 // pred_fallthru
    _
  // Predicated region
  $region6: #{conv_block_forward.1} parent=0 // pred_check
    _
  $region7: #{conv_block_forward.1} parent=0 // pred_check_branch
    %13 = sbr.rel (0) target = $region9
  $region8: #{conv_block_forward.1} parent=0 // pred_region
    _
  $region9: #{conv_block_forward.1} parent=0 // pred_fallthru
    _
  // Predicated region
  $region10: #{conv_block_forward.1} parent=0 // pred_check
    _
  $region11: #{conv_block_forward.1} parent=0 // pred_check_branch
    %15 = sbr.rel (0) target = $region13
  $region12: #{conv_block_forward.1} parent=0 // pred_region
    _
  $region13: #{conv_block_forward.1} parent=0 // pred_fallthru
    _
  // Predicated region
  $region14: #{conv_block_forward.1} parent=0 // pred_check
    _
  $region15: #{conv_block_forward.1} parent=0 // pred_check_branch
    %17 = sbr.rel (0) target = $region17
  $region16: #{conv_block_forward.1} parent=0 // pred_region
    _
  $region17: #{conv_block_forward.1} parent=0 // pred_fallthru
    _
  // Predicated region
  $region18: #{conv_block_forward.1} parent=0 // pred_check
    _
  $region19: #{conv_block_forward.1} parent=0 // pred_check_branch
    %19 = sbr.rel (0) target = $region21
  $region20: #{conv_block_forward.1} parent=0 // pred_region
    _
  $region21: #{conv_block_forward.1} parent=0 // pred_fallthru
    _
  %v20 = vld [vmem:[%s4] sm:$0xff]
  %v21 = vld [vmem:[%s4 + $0x8] sm:$0xff]
  %v22 = vld [vmem:[%s4 + $0x10] sm:$0xff]
  %v23 = vld [vmem:[%s4 + $0x18] sm:$0xff]
  %v24 = vld [vmem:[%s4 + $0x20] sm:$0xff]
  %v25 = vld [vmem:[%s4 + $0x28] sm:$0xff]
  %v26 = vld [vmem:[%s4 + $0x30] sm:$0xff]
  %v27 = vld [vmem:[%s4 + $0x38] sm:$0xff]
  %v28 = vld [vmem:[%s4 + $0x40] sm:$0xff]
  %v29 = vld [vmem:[%s4 + $0x48] sm:$0xff]
  %v30 = vld [vmem:[%s4 + $0x50] sm:$0xff]
  %v31 = vld [vmem:[%s4 + $0x58] sm:$0xff]
  %v32 = vld [vmem:[%s4 + $0x60] sm:$0xff]
  %v33 = vld [vmem:[%s4 + $0x68] sm:$0xff]
  %v34 = vld [vmem:[%s4 + $0x70] sm:$0xff]
  %v35 = vld [vmem:[%s4 + $0x78] sm:$0xff]
  %v36 = vld [vmem:[%s0] sm:$0xff]
  %v37 = vld [vmem:[%s0 + $0x8] sm:$0xff]
  %v38 = vld [vmem:[%s1] sm:$0xff]
  %v39 = vld [vmem:[%s1 + $0x8] sm:$0xff]
  %v40 = vld [vmem:[%s1 + $0x10] sm:$0xff]
  %v41 = vld [vmem:[%s1 + $0x18] sm:$0xff]
  %v42 = vld [vmem:[%s1 + $0x20] sm:$0xff]
  %v43 = vld [vmem:[%s1 + $0x28] sm:$0xff]
  %v44 = vld [vmem:[%s1 + $0x30] sm:$0xff]
  %v45 = vld [vmem:[%s1 + $0x38] sm:$0xff]
  %v46 = vld [vmem:[%s0 + $0x1] sm:$0xff]
  %v47 = vld [vmem:[%s0 + $0x9] sm:$0xff]
  %s48 = scalar_lea.vmem %s1, 64
  %v49 = vld [vmem:[%s48] sm:$0xff]
  %v50 = vld [vmem:[%s48 + $0x8] sm:$0xff]
  %v51 = vld [vmem:[%s48 + $0x10] sm:$0xff]
  %v52 = vld [vmem:[%s48 + $0x18] sm:$0xff]
  %v53 = vld [vmem:[%s48 + $0x20] sm:$0xff]
  %v54 = vld [vmem:[%s48 + $0x28] sm:$0xff]
  %v55 = vld [vmem:[%s48 + $0x30] sm:$0xff]
  %v56 = vld [vmem:[%s48 + $0x38] sm:$0xff]
  %vm57 = vcmask 523264
  %v59 = vsel %vm57, %v46, 0
  %v62 = vsel %vm57, %v47, 0
  %64 = vmatpush.msra.mxu0 0.0
  %65 = vmatpush.msra.mxu0 0.0
  %66 = vmatpush.msra.mxu0 0.0
  %67 = vmatpush.msra.mxu0 0.0
  %68 = vmatpush.msra.mxu0 0.0
  %69 = vmatpush.msra.mxu0 0.0
  %70 = vmatpush.msra.mxu0 0.0
  %71 = vmatpush.msra.mxu0 0.0
  %72 = vmatpush.msra.mxu0 %v56
  %73 = vmatpush.msra.mxu0 %v55
  %74 = vmatpush.msra.mxu0 %v54
  %75 = vmatpush.msra.mxu0 %v53
  %76 = vmatpush.msra.mxu0 %v52
  %77 = vmatpush.msra.mxu0 %v51
  %78 = vmatpush.msra.mxu0 %v50
  %79 = vmatpush.msra.mxu0 %v49
  %80 = vmatmul.f32.gmra.mxu0 %v59
  %v81 = vpop.f32.mrf.mxu0
  %v82 = vadd.f32 0.0, %v81
  %83 = vmatmul.f32.gmra.mxu0 %v62
  %v84 = vpop.f32.mrf.mxu0
  %v85 = vadd.f32 0.0, %v84
  %86 = vdwg.mxu0
  %v88 = vsel %vm57, %v36, 0
  %v91 = vsel %vm57, %v37, 0
  %93 = vmatpush.msra.mxu0 0.0
  %94 = vmatpush.msra.mxu0 0.0
  %95 = vmatpush.msra.mxu0 0.0
  %96 = vmatpush.msra.mxu0 0.0
  %97 = vmatpush.msra.mxu0 0.0
  %98 = vmatpush.msra.mxu0 0.0
  %99 = vmatpush.msra.mxu0 0.0
  %100 = vmatpush.msra.mxu0 0.0
  %101 = vmatpush.msra.mxu0 %v45
  %102 = vmatpush.msra.mxu0 %v44
  %103 = vmatpush.msra.mxu0 %v43
  %104 = vmatpush.msra.mxu0 %v42
  %105 = vmatpush.msra.mxu0 %v41
  %106 = vmatpush.msra.mxu0 %v40
  %107 = vmatpush.msra.mxu0 %v39
  %108 = vmatpush.msra.mxu0 %v38
  %109 = vmatmul.f32.gmra.mxu0 %v88
  %v110 = vpop.f32.mrf.mxu0
  %v111 = vadd.f32 %v82, %v110
  %112 = vmatmul.f32.gmra.mxu0 %v91
  %v113 = vpop.f32.mrf.mxu0
  %v114 = vadd.f32 %v85, %v113
  %115 = vdwg.mxu0
  %v116 = vld [vmem:[%s0 + $0x2] sm:$0xff]
  %v117 = vld [vmem:[%s0 + $0xa] sm:$0xff]
  %s118 = scalar_lea.vmem %s1, 128
  %v119 = vld [vmem:[%s118] sm:$0xff]
  %v120 = vld [vmem:[%s118 + $0x8] sm:$0xff]
  %v121 = vld [vmem:[%s118 + $0x10] sm:$0xff]
  %v122 = vld [vmem:[%s118 + $0x18] sm:$0xff]
  %v123 = vld [vmem:[%s118 + $0x20] sm:$0xff]
  %v124 = vld [vmem:[%s118 + $0x28] sm:$0xff]
  %v125 = vld [vmem:[%s118 + $0x30] sm:$0xff]
  %v126 = vld [vmem:[%s118 + $0x38] sm:$0xff]
  %v128 = vsel %vm57, %v116, 0
  %v131 = vsel %vm57, %v117, 0
  %133 = vmatpush.msra.mxu0 0.0
  %134 = vmatpush.msra.mxu0 0.0
  %135 = vmatpush.msra.mxu0 0.0
  %136 = vmatpush.msra.mxu0 0.0
  %137 = vmatpush.msra.mxu0 0.0
  %138 = vmatpush.msra.mxu0 0.0
  %139 = vmatpush.msra.mxu0 0.0
  %140 = vmatpush.msra.mxu0 0.0
  %141 = vmatpush.msra.mxu0 %v126
  %142 = vmatpush.msra.mxu0 %v125
  %143 = vmatpush.msra.mxu0 %v124
  %144 = vmatpush.msra.mxu0 %v123
  %145 = vmatpush.msra.mxu0 %v122
  %146 = vmatpush.msra.mxu0 %v121
  %147 = vmatpush.msra.mxu0 %v120
  %148 = vmatpush.msra.mxu0 %v119
  %149 = vmatmul.f32.gmra.mxu0 %v128
  %v150 = vpop.f32.mrf.mxu0
  %v151 = vadd.f32 0.0, %v150
  %152 = vmatmul.f32.gmra.mxu0 %v131
  %v153 = vpop.f32.mrf.mxu0
  %v154 = vadd.f32 0.0, %v153
  %155 = vdwg.mxu0
  %v156 = vadd.f32 %v111, %v151
  %v157 = vadd.f32 %v114, %v154
  %s158 = scalar_lea.vmem %s0, 24
  %v159 = vld [vmem:[%s158] sm:$0xff]
  %v160 = vld [vmem:[%s158 + $0x8] sm:$0xff]
  %v161 = vld [vmem:[%s158 + $0x1] sm:$0xff]
  %v162 = vld [vmem:[%s158 + $0x9] sm:$0xff]
  %v164 = vsel %vm57, %v161, 0
  %v167 = vsel %vm57, %v162, 0
  %169 = vmatpush.msra.mxu0 0.0
  %170 = vmatpush.msra.mxu0 0.0
  %171 = vmatpush.msra.mxu0 0.0
  %172 = vmatpush.msra.mxu0 0.0
  %173 = vmatpush.msra.mxu0 0.0
  %174 = vmatpush.msra.mxu0 0.0
  %175 = vmatpush.msra.mxu0 0.0
  %176 = vmatpush.msra.mxu0 0.0
  %177 = vmatpush.msra.mxu0 %v56
  %178 = vmatpush.msra.mxu0 %v55
  %179 = vmatpush.msra.mxu0 %v54
  %180 = vmatpush.msra.mxu0 %v53
  %181 = vmatpush.msra.mxu0 %v52
  %182 = vmatpush.msra.mxu0 %v51
  %183 = vmatpush.msra.mxu0 %v50
  %184 = vmatpush.msra.mxu0 %v49
  %185 = vmatmul.f32.gmra.mxu0 %v164
  %v186 = vpop.f32.mrf.mxu0
  %v187 = vadd.f32 0.0, %v186
  %188 = vmatmul.f32.gmra.mxu0 %v167
  %v189 = vpop.f32.mrf.mxu0
  %v190 = vadd.f32 0.0, %v189
  %191 = vdwg.mxu0
  %v193 = vsel %vm57, %v159, 0
  %v196 = vsel %vm57, %v160, 0
  %198 = vmatpush.msra.mxu0 0.0
  %199 = vmatpush.msra.mxu0 0.0
  %200 = vmatpush.msra.mxu0 0.0
  %201 = vmatpush.msra.mxu0 0.0
  %202 = vmatpush.msra.mxu0 0.0
  %203 = vmatpush.msra.mxu0 0.0
  %204 = vmatpush.msra.mxu0 0.0
  %205 = vmatpush.msra.mxu0 0.0
  %206 = vmatpush.msra.mxu0 %v45
  %207 = vmatpush.msra.mxu0 %v44
  %208 = vmatpush.msra.mxu0 %v43
  %209 = vmatpush.msra.mxu0 %v42
  %210 = vmatpush.msra.mxu0 %v41
  %211 = vmatpush.msra.mxu0 %v40
  %212 = vmatpush.msra.mxu0 %v39
  %213 = vmatpush.msra.mxu0 %v38
  %214 = vmatmul.f32.gmra.mxu0 %v193
  %v215 = vpop.f32.mrf.mxu0
  %v216 = vadd.f32 %v187, %v215
  %217 = vmatmul.f32.gmra.mxu0 %v196
  %v218 = vpop.f32.mrf.mxu0
  %v219 = vadd.f32 %v190, %v218
  %220 = vdwg.mxu0
  %v221 = vld [vmem:[%s158 + $0x2] sm:$0xff]
  %v222 = vld [vmem:[%s158 + $0xa] sm:$0xff]
  %v224 = vsel %vm57, %v221, 0
  %v227 = vsel %vm57, %v222, 0
  %229 = vmatpush.msra.mxu0 0.0
  %230 = vmatpush.msra.mxu0 0.0
  %231 = vmatpush.msra.mxu0 0.0
  %232 = vmatpush.msra.mxu0 0.0
  %233 = vmatpush.msra.mxu0 0.0
  %234 = vmatpush.msra.mxu0 0.0
  %235 = vmatpush.msra.mxu0 0.0
  %236 = vmatpush.msra.mxu0 0.0
  %237 = vmatpush.msra.mxu0 %v126
  %238 = vmatpush.msra.mxu0 %v125
  %239 = vmatpush.msra.mxu0 %v124
  %240 = vmatpush.msra.mxu0 %v123
  %241 = vmatpush.msra.mxu0 %v122
  %242 = vmatpush.msra.mxu0 %v121
  %243 = vmatpush.msra.mxu0 %v120
  %244 = vmatpush.msra.mxu0 %v119
  %245 = vmatmul.f32.gmra.mxu0 %v224
  %v246 = vpop.f32.mrf.mxu0
  %v247 = vadd.f32 0.0, %v246
  %248 = vmatmul.f32.gmra.mxu0 %v227
  %v249 = vpop.f32.mrf.mxu0
  %v250 = vadd.f32 0.0, %v249
  %251 = vdwg.mxu0
  %v252 = vadd.f32 %v216, %v247
  %v253 = vadd.f32 %v219, %v250
  %v254 = vld [vmem:[%s3] sm:$0x1]
  %v255 = vld [vmem:[%s3 + $0x1] sm:$0x1]
  %v256 = vadd.f32 %v156, %v157
  %v257 = vrot.slane %v256, 4
  %v258 = vadd.f32 %v256, %v257
  %v259 = vrot.slane %v258, 2
  %v260 = vadd.f32 %v258, %v259
  %v261 = vrot.slane %v260, 1
  %v262 = vadd.f32 %v260, %v261
  %v263 = vadd.f32 %v262, 0.0
  %v264 = vmul.f32 %v156, %v156
  %v265 = vmul.f32 %v157, %v157
  %v266 = vadd.f32 %v264, %v265
  %v267 = vrot.slane %v266, 4
  %v268 = vadd.f32 %v266, %v267
  %v269 = vrot.slane %v268, 2
  %v270 = vadd.f32 %v268, %v269
  %v271 = vrot.slane %v270, 1
  %v272 = vadd.f32 %v270, %v271
  %v273 = vadd.f32 %v272, 0.0
  %v274 = vadd.f32 %v252, %v253
  %v275 = vrot.slane %v274, 4
  %v276 = vadd.f32 %v274, %v275
  %v277 = vrot.slane %v276, 2
  %v278 = vadd.f32 %v276, %v277
  %v279 = vrot.slane %v278, 1
  %v280 = vadd.f32 %v278, %v279
  %v281 = vadd.f32 %v263, %v280
  %v282 = vmul.f32 %v252, %v252
  %v283 = vmul.f32 %v253, %v253
  %v284 = vadd.f32 %v282, %v283
  %v285 = vrot.slane %v284, 4
  %v286 = vadd.f32 %v284, %v285
  %v287 = vrot.slane %v286, 2
  %v288 = vadd.f32 %v286, %v287
  %v289 = vrot.slane %v288, 1
  %v290 = vadd.f32 %v288, %v289
  %v291 = vadd.f32 %v273, %v290
  %292 = vmatpush.msra.mxu0 %v35
  %293 = vmatpush.msra.mxu0 %v34
  %294 = vmatpush.msra.mxu0 %v33
  %295 = vmatpush.msra.mxu0 %v32
  %296 = vmatpush.msra.mxu0 %v31
  %297 = vmatpush.msra.mxu0 %v30
  %298 = vmatpush.msra.mxu0 %v29
  %299 = vmatpush.msra.mxu0 %v28
  %300 = vmatpush.msra.mxu0 %v27
  %301 = vmatpush.msra.mxu0 %v26
  %302 = vmatpush.msra.mxu0 %v25
  %303 = vmatpush.msra.mxu0 %v24
  %304 = vmatpush.msra.mxu0 %v23
  %305 = vmatpush.msra.mxu0 %v22
  %306 = vmatpush.msra.mxu0 %v21
  %307 = vmatpush.msra.mxu0 %v20
  %308 = vmatmul.f32.gmra.mxu0 %v281
  %v309 = vpop.f32.mrf.mxu0
  %v310 = vadd.f32 0.0, %v309
  %311 = vdwg.mxu0
  %v312 = vmul.f32 %v310, 0.001953125
  %313 = vmatpush.msra.mxu0 %v35
  %314 = vmatpush.msra.mxu0 %v34
  %315 = vmatpush.msra.mxu0 %v33
  %316 = vmatpush.msra.mxu0 %v32
  %317 = vmatpush.msra.mxu0 %v31
  %318 = vmatpush.msra.mxu0 %v30
  %319 = vmatpush.msra.mxu0 %v29
  %320 = vmatpush.msra.mxu0 %v28
  %321 = vmatpush.msra.mxu0 %v27
  %322 = vmatpush.msra.mxu0 %v26
  %323 = vmatpush.msra.mxu0 %v25
  %324 = vmatpush.msra.mxu0 %v24
  %325 = vmatpush.msra.mxu0 %v23
  %326 = vmatpush.msra.mxu0 %v22
  %327 = vmatpush.msra.mxu0 %v21
  %328 = vmatpush.msra.mxu0 %v20
  %329 = vmatmul.f32.gmra.mxu0 %v291
  %v330 = vpop.f32.mrf.mxu0
  %v331 = vadd.f32 0.0, %v330
  %332 = vdwg.mxu0
  %v333 = vmul.f32 %v331, 0.001953125
  %v334 = vmul.f32 %v312, %v312
  %v335 = vsub.f32 %v333, %v334
  %v336 = vadd.f32 %v335, 1e-05
  %v337 = vrsqrt.pop %v336
  %v338 = vmul.f32 %v337, %v336
  %v339 = vmul.f32 %v338, %v337
  %v340 = vmul.f32 0.5, %v339
  %v341 = vsub.f32 1.5, %v340
  %v342 = vmul.f32 %v337, %v341
  %vm343 = vweird.f32 %v336
  %vm344 = vweird.f32 %v337
  %vm345 = vmor %vm343, %vm344
  %v346 = vsel %vm345, %v337, %v342
  %v347 = vmul.f32 %v254, %v346
  %v348 = vmul.f32 %v312, %v347
  %v349 = vsub.f32 %v255, %v348
  %v350 = vperm.slane %v347, 0
  %v351 = vmul.f32 %v156, %v350
  %v352 = vmul.f32 %v157, %v350
  %v353 = vperm.slane %v349, 0
  %v354 = vadd.f32 %v351, %v353
  %v355 = vadd.f32 %v352, %v353
  %v356 = vmax.f32 %v354, 0.0
  %v357 = vmax.f32 %v355, 0.0
  %v358 = vmul.f32 %v252, %v350
  %v359 = vmul.f32 %v253, %v350
  %v360 = vadd.f32 %v358, %v353
  %v361 = vadd.f32 %v359, %v353
  %v362 = vmax.f32 %v360, 0.0
  %v363 = vmax.f32 %v361, 0.0
  %364 = vst [vmem:[#allocation2] sm:$0xff] 0.0
  %365 = vst [vmem:[#allocation2 + $0x8] sm:$0xff] 0.0
  %366 = vst [vmem:[#allocation2 + $0x10] sm:$0xff] 0.0
  %367 = vst [vmem:[#allocation2 + $0x18] sm:$0xff] 0.0
  %368 = vst [vmem:[#allocation2 + $0x20] sm:$0xff] 0.0
  %369 = vst [vmem:[#allocation2 + $0x28] sm:$0xff] 0.0
  %370 = vst [vmem:[#allocation2 + $0x30] sm:$0xff] 0.0
  %371 = vst [vmem:[#allocation2 + $0x38] sm:$0xff] 0.0
  %372 = vst [vmem:[#allocation2 + $0x8] sm:$0xff] %v356
  %373 = vst [vmem:[#allocation2 + $0x10] sm:$0xff] %v357
  %s374 = scalar_lea.vmem [#allocation2], 32
  %375 = vst [vmem:[%s374 + $0x8] sm:$0xff] %v362
  %376 = vst [vmem:[%s374 + $0x10] sm:$0xff] %v363
  %v377 = vld [vmem:[#allocation2 + $0x7] sm:$0xff]
  %v378 = vld [vmem:[#allocation2 + $0xf] sm:$0xff]
  %v379 = vld [vmem:[%s2] sm:$0xff]
  %v380 = vld [vmem:[%s2 + $0x8] sm:$0xff]
  %v381 = vld [vmem:[%s2 + $0x10] sm:$0xff]
  %v382 = vld [vmem:[%s2 + $0x18] sm:$0xff]
  %v383 = vld [vmem:[%s2 + $0x20] sm:$0xff]
  %v384 = vld [vmem:[%s2 + $0x28] sm:$0xff]
  %v385 = vld [vmem:[%s2 + $0x30] sm:$0xff]
  %v386 = vld [vmem:[%s2 + $0x38] sm:$0xff]
  %v387 = vld [vmem:[%s2 + $0x40] sm:$0xff]
  %v388 = vld [vmem:[%s2 + $0x48] sm:$0xff]
  %v389 = vld [vmem:[%s2 + $0x50] sm:$0xff]
  %v390 = vld [vmem:[%s2 + $0x58] sm:$0xff]
  %v391 = vld [vmem:[%s2 + $0x60] sm:$0xff]
  %v392 = vld [vmem:[%s2 + $0x68] sm:$0xff]
  %v393 = vld [vmem:[%s2 + $0x70] sm:$0xff]
  %v394 = vld [vmem:[%s2 + $0x78] sm:$0xff]
  %v395 = vld [vmem:[#allocation2 + $0x8] sm:$0xff]
  %v396 = vld [vmem:[#allocation2 + $0x10] sm:$0xff]
  %s397 = scalar_lea.vmem %s2, 128
  %v398 = vld [vmem:[%s397] sm:$0xff]
  %v399 = vld [vmem:[%s397 + $0x8] sm:$0xff]
  %v400 = vld [vmem:[%s397 + $0x10] sm:$0xff]
  %v401 = vld [vmem:[%s397 + $0x18] sm:$0xff]
  %v402 = vld [vmem:[%s397 + $0x20] sm:$0xff]
  %v403 = vld [vmem:[%s397 + $0x28] sm:$0xff]
  %v404 = vld [vmem:[%s397 + $0x30] sm:$0xff]
  %v405 = vld [vmem:[%s397 + $0x38] sm:$0xff]
  %v406 = vld [vmem:[%s397 + $0x40] sm:$0xff]
  %v407 = vld [vmem:[%s397 + $0x48] sm:$0xff]
  %v408 = vld [vmem:[%s397 + $0x50] sm:$0xff]
  %v409 = vld [vmem:[%s397 + $0x58] sm:$0xff]
  %v410 = vld [vmem:[%s397 + $0x60] sm:$0xff]
  %v411 = vld [vmem:[%s397 + $0x68] sm:$0xff]
  %v412 = vld [vmem:[%s397 + $0x70] sm:$0xff]
  %v413 = vld [vmem:[%s397 + $0x78] sm:$0xff]
  %414 = vmatpush.msra.mxu0 %v413
  %415 = vmatpush.msra.mxu0 %v412
  %416 = vmatpush.msra.mxu0 %v411
  %417 = vmatpush.msra.mxu0 %v410
  %418 = vmatpush.msra.mxu0 %v409
  %419 = vmatpush.msra.mxu0 %v408
  %420 = vmatpush.msra.mxu0 %v407
  %421 = vmatpush.msra.mxu0 %v406
  %422 = vmatpush.msra.mxu0 %v405
  %423 = vmatpush.msra.mxu0 %v404
  %424 = vmatpush.msra.mxu0 %v403
  %425 = vmatpush.msra.mxu0 %v402
  %426 = vmatpush.msra.mxu0 %v401
  %427 = vmatpush.msra.mxu0 %v400
  %428 = vmatpush.msra.mxu0 %v399
  %429 = vmatpush.msra.mxu0 %v398
  %430 = vmatmul.f32.gmra.mxu0 %v395
  %v431 = vpop.f32.mrf.mxu0
  %v432 = vadd.f32 0.0, %v431
  %433 = vmatmul.f32.gmra.mxu0 %v396
  %v434 = vpop.f32.mrf.mxu0
  %v435 = vadd.f32 0.0, %v434
  %436 = vdwg.mxu0
  %437 = vmatpush.msra.mxu0 %v394
  %438 = vmatpush.msra.mxu0 %v393
  %439 = vmatpush.msra.mxu0 %v392
  %440 = vmatpush.msra.mxu0 %v391
  %441 = vmatpush.msra.mxu0 %v390
  %442 = vmatpush.msra.mxu0 %v389
  %443 = vmatpush.msra.mxu0 %v388
  %444 = vmatpush.msra.mxu0 %v387
  %445 = vmatpush.msra.mxu0 %v386
  %446 = vmatpush.msra.mxu0 %v385
  %447 = vmatpush.msra.mxu0 %v384
  %448 = vmatpush.msra.mxu0 %v383
  %449 = vmatpush.msra.mxu0 %v382
  %450 = vmatpush.msra.mxu0 %v381
  %451 = vmatpush.msra.mxu0 %v380
  %452 = vmatpush.msra.mxu0 %v379
  %453 = vmatmul.f32.gmra.mxu0 %v377
  %v454 = vpop.f32.mrf.mxu0
  %v455 = vadd.f32 %v432, %v454
  %456 = vmatmul.f32.gmra.mxu0 %v378
  %v457 = vpop.f32.mrf.mxu0
  %v458 = vadd.f32 %v435, %v457
  %459 = vdwg.mxu0
  %v460 = vld [vmem:[#allocation2 + $0x9] sm:$0xff]
  %v461 = vld [vmem:[#allocation2 + $0x11] sm:$0xff]
  %s462 = scalar_lea.vmem %s2, 256
  %v463 = vld [vmem:[%s462] sm:$0xff]
  %v464 = vld [vmem:[%s462 + $0x8] sm:$0xff]
  %v465 = vld [vmem:[%s462 + $0x10] sm:$0xff]
  %v466 = vld [vmem:[%s462 + $0x18] sm:$0xff]
  %v467 = vld [vmem:[%s462 + $0x20] sm:$0xff]
  %v468 = vld [vmem:[%s462 + $0x28] sm:$0xff]
  %v469 = vld [vmem:[%s462 + $0x30] sm:$0xff]
  %v470 = vld [vmem:[%s462 + $0x38] sm:$0xff]
  %v471 = vld [vmem:[%s462 + $0x40] sm:$0xff]
  %v472 = vld [vmem:[%s462 + $0x48] sm:$0xff]
  %v473 = vld [vmem:[%s462 + $0x50] sm:$0xff]
  %v474 = vld [vmem:[%s462 + $0x58] sm:$0xff]
  %v475 = vld [vmem:[%s462 + $0x60] sm:$0xff]
  %v476 = vld [vmem:[%s462 + $0x68] sm:$0xff]
  %v477 = vld [vmem:[%s462 + $0x70] sm:$0xff]
  %v478 = vld [vmem:[%s462 + $0x78] sm:$0xff]
  %479 = vmatpush.msra.mxu0 %v478
  %480 = vmatpush.msra.mxu0 %v477
  %481 = vmatpush.msra.mxu0 %v476
  %482 = vmatpush.msra.mxu0 %v475
  %483 = vmatpush.msra.mxu0 %v474
  %484 = vmatpush.msra.mxu0 %v473
  %485 = vmatpush.msra.mxu0 %v472
  %486 = vmatpush.msra.mxu0 %v471
  %487 = vmatpush.msra.mxu0 %v470
  %488 = vmatpush.msra.mxu0 %v469
  %489 = vmatpush.msra.mxu0 %v468
  %490 = vmatpush.msra.mxu0 %v467
  %491 = vmatpush.msra.mxu0 %v466
  %492 = vmatpush.msra.mxu0 %v465
  %493 = vmatpush.msra.mxu0 %v464
  %494 = vmatpush.msra.mxu0 %v463
  %495 = vmatmul.f32.gmra.mxu0 %v460
  %v496 = vpop.f32.mrf.mxu0
  %v497 = vadd.f32 0.0, %v496
  %498 = vmatmul.f32.gmra.mxu0 %v461
  %v499 = vpop.f32.mrf.mxu0
  %v500 = vadd.f32 0.0, %v499
  %501 = vdwg.mxu0
  %v502 = vadd.f32 %v455, %v497
  %v503 = vadd.f32 %v458, %v500
  %v504 = vld [vmem:[%s374 + $0x7] sm:$0xff]
  %v505 = vld [vmem:[%s374 + $0xf] sm:$0xff]
  %v506 = vld [vmem:[%s374 + $0x8] sm:$0xff]
  %v507 = vld [vmem:[%s374 + $0x10] sm:$0xff]
  %508 = vmatpush.msra.mxu0 %v413
  %509 = vmatpush.msra.mxu0 %v412
  %510 = vmatpush.msra.mxu0 %v411
  %511 = vmatpush.msra.mxu0 %v410
  %512 = vmatpush.msra.mxu0 %v409
  %513 = vmatpush.msra.mxu0 %v408
  %514 = vmatpush.msra.mxu0 %v407
  %515 = vmatpush.msra.mxu0 %v406
  %516 = vmatpush.msra.mxu0 %v405
  %517 = vmatpush.msra.mxu0 %v404
  %518 = vmatpush.msra.mxu0 %v403
  %519 = vmatpush.msra.mxu0 %v402
  %520 = vmatpush.msra.mxu0 %v401
  %521 = vmatpush.msra.mxu0 %v400
  %522 = vmatpush.msra.mxu0 %v399
  %523 = vmatpush.msra.mxu0 %v398
  %524 = vmatmul.f32.gmra.mxu0 %v506
  %v525 = vpop.f32.mrf.mxu0
  %v526 = vadd.f32 0.0, %v525
  %527 = vmatmul.f32.gmra.mxu0 %v507
  %v528 = vpop.f32.mrf.mxu0
  %v529 = vadd.f32 0.0, %v528
  %530 = vdwg.mxu0
  %531 = vmatpush.msra.mxu0 %v394
  %532 = vmatpush.msra.mxu0 %v393
  %533 = vmatpush.msra.mxu0 %v392
  %534 = vmatpush.msra.mxu0 %v391
  %535 = vmatpush.msra.mxu0 %v390
  %536 = vmatpush.msra.mxu0 %v389
  %537 = vmatpush.msra.mxu0 %v388
  %538 = vmatpush.msra.mxu0 %v387
  %539 = vmatpush.msra.mxu0 %v386
  %540 = vmatpush.msra.mxu0 %v385
  %541 = vmatpush.msra.mxu0 %v384
  %542 = vmatpush.msra.mxu0 %v383
  %543 = vmatpush.msra.mxu0 %v382
  %544 = vmatpush.msra.mxu0 %v381
  %545 = vmatpush.msra.mxu0 %v380
  %546 = vmatpush.msra.mxu0 %v379
  %547 = vmatmul.f32.gmra.mxu0 %v504
  %v548 = vpop.f32.mrf.mxu0
  %v549 = vadd.f32 %v526, %v548
  %550 = vmatmul.f32.gmra.mxu0 %v505
  %v551 = vpop.f32.mrf.mxu0
  %v552 = vadd.f32 %v529, %v551
  %553 = vdwg.mxu0
  %v554 = vld [vmem:[%s374 + $0x9] sm:$0xff]
  %v555 = vld [vmem:[%s374 + $0x11] sm:$0xff]
  %556 = vmatpush.msra.mxu0 %v478
  %557 = vmatpush.msra.mxu0 %v477
  %558 = vmatpush.msra.mxu0 %v476
  %559 = vmatpush.msra.mxu0 %v475
  %560 = vmatpush.msra.mxu0 %v474
  %561 = vmatpush.msra.mxu0 %v473
  %562 = vmatpush.msra.mxu0 %v472
  %563 = vmatpush.msra.mxu0 %v471
  %564 = vmatpush.msra.mxu0 %v470
  %565 = vmatpush.msra.mxu0 %v469
  %566 = vmatpush.msra.mxu0 %v468
  %567 = vmatpush.msra.mxu0 %v467
  %568 = vmatpush.msra.mxu0 %v466
  %569 = vmatpush.msra.mxu0 %v465
  %570 = vmatpush.msra.mxu0 %v464
  %571 = vmatpush.msra.mxu0 %v463
  %572 = vmatmul.f32.gmra.mxu0 %v554
  %v573 = vpop.f32.mrf.mxu0
  %v574 = vadd.f32 0.0, %v573
  %575 = vmatmul.f32.gmra.mxu0 %v555
  %v576 = vpop.f32.mrf.mxu0
  %v577 = vadd.f32 0.0, %v576
  %578 = vdwg.mxu0
  %v579 = vadd.f32 %v549, %v574
  %v580 = vadd.f32 %v552, %v577
  %v581 = vld [vmem:[%s3 + $0x2] sm:$0x1]
  %v582 = vld [vmem:[%s3 + $0x3] sm:$0x1]
  %v583 = vadd.f32 %v502, %v503
  %v584 = vrot.slane %v583, 4
  %v585 = vadd.f32 %v583, %v584
  %v586 = vrot.slane %v585, 2
  %v587 = vadd.f32 %v585, %v586
  %v588 = vrot.slane %v587, 1
  %v589 = vadd.f32 %v587, %v588
  %v590 = vadd.f32 %v589, 0.0
  %v591 = vmul.f32 %v502, %v502
  %v592 = vmul.f32 %v503, %v503
  %v593 = vadd.f32 %v591, %v592
  %v594 = vrot.slane %v593, 4
  %v595 = vadd.f32 %v593, %v594
  %v596 = vrot.slane %v595, 2
  %v597 = vadd.f32 %v595, %v596
  %v598 = vrot.slane %v597, 1
  %v599 = vadd.f32 %v597, %v598
  %v600 = vadd.f32 %v599, 0.0
  %v601 = vadd.f32 %v579, %v580
  %v602 = vrot.slane %v601, 4
  %v603 = vadd.f32 %v601, %v602
  %v604 = vrot.slane %v603, 2
  %v605 = vadd.f32 %v603, %v604
  %v606 = vrot.slane %v605, 1
  %v607 = vadd.f32 %v605, %v606
  %v608 = vadd.f32 %v590, %v607
  %v609 = vmul.f32 %v579, %v579
  %v610 = vmul.f32 %v580, %v580
  %v611 = vadd.f32 %v609, %v610
  %v612 = vrot.slane %v611, 4
  %v613 = vadd.f32 %v611, %v612
  %v614 = vrot.slane %v613, 2
  %v615 = vadd.f32 %v613, %v614
  %v616 = vrot.slane %v615, 1
  %v617 = vadd.f32 %v615, %v616
  %v618 = vadd.f32 %v600, %v617
  %619 = vmatpush.msra.mxu0 %v35
  %620 = vmatpush.msra.mxu0 %v34
  %621 = vmatpush.msra.mxu0 %v33
  %622 = vmatpush.msra.mxu0 %v32
  %623 = vmatpush.msra.mxu0 %v31
  %624 = vmatpush.msra.mxu0 %v30
  %625 = vmatpush.msra.mxu0 %v29
  %626 = vmatpush.msra.mxu0 %v28
  %627 = vmatpush.msra.mxu0 %v27
  %628 = vmatpush.msra.mxu0 %v26
  %629 = vmatpush.msra.mxu0 %v25
  %630 = vmatpush.msra.mxu0 %v24
  %631 = vmatpush.msra.mxu0 %v23
  %632 = vmatpush.msra.mxu0 %v22
  %633 = vmatpush.msra.mxu0 %v21
  %634 = vmatpush.msra.mxu0 %v20
  %635 = vmatmul.f32.gmra.mxu0 %v608
  %v636 = vpop.f32.mrf.mxu0
  %v637 = vadd.f32 0.0, %v636
  %638 = vdwg.mxu0
  %v639 = vmul.f32 %v637, 0.001953125
  %640 = vmatpush.msra.mxu0 %v35
  %641 = vmatpush.msra.mxu0 %v34
  %642 = vmatpush.msra.mxu0 %v33
  %643 = vmatpush.msra.mxu0 %v32
  %644 = vmatpush.msra.mxu0 %v31
  %645 = vmatpush.msra.mxu0 %v30
  %646 = vmatpush.msra.mxu0 %v29
  %647 = vmatpush.msra.mxu0 %v28
  %648 = vmatpush.msra.mxu0 %v27
  %649 = vmatpush.msra.mxu0 %v26
  %650 = vmatpush.msra.mxu0 %v25
  %651 = vmatpush.msra.mxu0 %v24
  %652 = vmatpush.msra.mxu0 %v23
  %653 = vmatpush.msra.mxu0 %v22
  %654 = vmatpush.msra.mxu0 %v21
  %655 = vmatpush.msra.mxu0 %v20
  %656 = vmatmul.f32.gmra.mxu0 %v618
  %v657 = vpop.f32.mrf.mxu0
  %v658 = vadd.f32 0.0, %v657
  %659 = vdwg.mxu0
  %v660 = vmul.f32 %v658, 0.001953125
  %v661 = vmul.f32 %v639, %v639
  %v662 = vsub.f32 %v660, %v661
  %v663 = vadd.f32 %v662, 1e-05
  %v664 = vrsqrt.pop %v663
  %v665 = vmul.f32 %v664, %v663
  %v666 = vmul.f32 %v665, %v664
  %v667 = vmul.f32 0.5, %v666
  %v668 = vsub.f32 1.5, %v667
  %v669 = vmul.f32 %v664, %v668
  %vm670 = vweird.f32 %v663
  %vm671 = vweird.f32 %v664
  %vm672 = vmor %vm670, %vm671
  %v673 = vsel %vm672, %v664, %v669
  %v674 = vmul.f32 %v581, %v673
  %v675 = vmul.f32 %v639, %v674
  %v676 = vsub.f32 %v582, %v675
  %v677 = vperm.slane %v674, 0
  %v678 = vmul.f32 %v502, %v677
  %v679 = vmul.f32 %v503, %v677
  %v680 = vperm.slane %v676, 0
  %v681 = vadd.f32 %v678, %v680
  %v682 = vadd.f32 %v679, %v680
  %v683 = vmax.f32 %v681, 0.0
  %v684 = vmax.f32 %v682, 0.0
  %v685 = vmul.f32 %v579, %v677
  %v686 = vmul.f32 %v580, %v677
  %v687 = vadd.f32 %v685, %v680
  %v688 = vadd.f32 %v686, %v680
  %v689 = vmax.f32 %v687, 0.0
  %v690 = vmax.f32 %v688, 0.0
  %691 = vst [vmem:[%s5] sm:$0xff] %v683
  %692 = vst [vmem:[%s5 + $0x8] sm:$0xff] %v684
  %693 = vst [vmem:[%s5 + $0x10] sm:$0xff] %v689
  %694 = vst [vmem:[%s5 + $0x18] sm:$0xff] %v690
  // Predicated region
  $region22: #{conv_block_forward.1} parent=0 // pred_check
    _
  $region23: #{conv_block_forward.1} parent=0 // pred_check_branch
    %696 = sbr.rel (0) target = $region25
  $region24: #{conv_block_forward.1} parent=0 // pred_region
    _
  $region25: #{conv_block_forward.1} parent=0 // pred_fallthru
    _
  // Predicated region
  $region26: #{conv_block_forward.1} parent=0 // pred_check
    _
  $region27: #{conv_block_forward.1} parent=0 // pred_check_branch
    %698 = sbr.rel (0) target = $region29
  $region28: #{conv_block_forward.1} parent=0 // pred_region
    _
  $region29: #{conv_block_forward.1} parent=0 // pred_fallthru
    _

</llo_original>
